<compile_context>
chip_gen: v7x
topology: tpu7x:2x2x1
jax: 0.10.0
libtpu: 0.0.40
codegen_flags: <defaults>
</compile_context>

<pallas_src>
import functools

import jax
import jax.numpy as jnp
from jax.experimental import pallas as pl
from jax.experimental.pallas import tpu as pltpu

_LANES = 128


def _leaky_relu(x, slope=0.01):
    # maximum(x, slope*x) == leaky_relu for 0 < slope < 1.
    return jnp.maximum(x, slope * x)


def _make_kernel(precision):
    def pc_resnet_block_kernel(x_ref, w1_ref, b1_ref, w2_ref, b2_ref, o_ref):
        x = x_ref[...]
        x_f32 = x.astype(jnp.float32)

        # linear_1 + leaky_relu (f32 accumulation on the MXU).
        h = jnp.dot(x, w1_ref[...], preferred_element_type=jnp.float32,
                    precision=precision)
        h = _leaky_relu(h + b1_ref[...])          # biases kept f32

        # linear_2 + bias + residual + leaky_relu.
        y = jnp.dot(h.astype(w2_ref.dtype), w2_ref[...],
                    preferred_element_type=jnp.float32, precision=precision)
        y = _leaky_relu(y + b2_ref[...] + x_f32)

        o_ref[...] = y.astype(o_ref.dtype)

    return pc_resnet_block_kernel


@functools.partial(jax.jit, static_argnames=("tile_rows", "stream_dtype"))
def pc_resnet_block(x, w1, b1, w2, b2, *, tile_rows=2048, stream_dtype=None):
    """x: (N, E); w1, w2: (E, E) pre-transposed (in, out); b1, b2: (E,).

    stream_dtype: optionally jnp.bfloat16 to halve streamed activation/weight
    bytes (recommended on v6e/v7x; keep None -> f32 on v5e).
    """
    n, e = x.shape
    out_dtype = x.dtype

    # ---- Lane packing: pack g feature groups into a 128-wide lane slab. ----
    g = _LANES // e if (e < _LANES and _LANES % e == 0) else 1
    f = g * e
    n_pad = ((n + g - 1) // g) * g
    if n_pad != n:
        x = jnp.pad(x, ((0, n_pad - n), (0, 0)))
    m = n_pad // g

    x_pk = x.reshape(m, f)
    eye_g = jnp.eye(g, dtype=w1.dtype)
    w1_pk = jnp.kron(eye_g, w1)        # (f, f) block-diagonal: no cross-group leakage
    w2_pk = jnp.kron(eye_g, w2)
    b1_pk = jnp.tile(b1.astype(jnp.float32).reshape(1, e), (1, g))
    b2_pk = jnp.tile(b2.astype(jnp.float32).reshape(1, e), (1, g))

    if stream_dtype is not None and jnp.dtype(stream_dtype) != x_pk.dtype:
        x_pk = x_pk.astype(stream_dtype)
        w1_pk = w1_pk.astype(stream_dtype)
        w2_pk = w2_pk.astype(stream_dtype)

    compute_dtype = x_pk.dtype
    precision = (jax.lax.Precision.HIGHEST
                 if jnp.dtype(compute_dtype) == jnp.float32
                 else jax.lax.Precision.DEFAULT)

    # ---- Row tiling over packed rows. ----
    tn = min(tile_rows, m)
    if m >= 16:
        # Keep >=2 grid steps so the "parallel" axis shards across v7x's 2 TCs.
        half = max(8, (pl.cdiv(m, 2) // 8) * 8)
        tn = min(tn, half)
    if tn < m:
        tn = max(8, (tn // 8) * 8)     # (8,128) block constraint for partial tiles
    grid = (pl.cdiv(m, tn),)

    act_bytes = jnp.dtype(compute_dtype).itemsize
    cost = pl.CostEstimate(
        flops=4 * m * f * f + 6 * m * f,                 # two matmuls + elementwise
        transcendentals=0,
        bytes_accessed=2 * m * f * act_bytes             # x in, out out
        + 2 * f * f * act_bytes                          # weights
        + 2 * f * 4,                                     # biases (f32)
    )

    out_pk = pl.pallas_call(
        _make_kernel(precision),
        out_shape=jax.ShapeDtypeStruct((m, f), compute_dtype),
        grid=grid,
        in_specs=[
            pl.BlockSpec((tn, f), lambda i: (i, 0)),     # x: streamed row tiles
            pl.BlockSpec((f, f), lambda i: (0, 0)),      # w1: resident
            pl.BlockSpec((1, f), lambda i: (0, 0)),      # b1: resident
            pl.BlockSpec((f, f), lambda i: (0, 0)),      # w2: resident
            pl.BlockSpec((1, f), lambda i: (0, 0)),      # b2: resident
        ],
        out_specs=pl.BlockSpec((tn, f), lambda i: (i, 0)),
        compiler_params=pltpu.CompilerParams(
            dimension_semantics=("parallel",),
        ),
        cost_estimate=cost,
    )(x_pk, w1_pk, b1_pk, w2_pk, b2_pk)

    # Unpack: (m, g*e) -> (n_pad, e) -> drop padded rows, restore caller dtype.
    return out_pk.reshape(n_pad, e)[:n].astype(out_dtype)


def reference(x, w1, b1, w2, b2):
    hp = jax.lax.Precision.HIGHEST
    h = jnp.dot(x, w1, precision=hp) + b1
    h = jnp.maximum(h, 0.01 * h)
    y = jnp.dot(h, w2, precision=hp) + b2 + x
    return jnp.maximum(y, 0.01 * y)


if __name__ == "__main__":
    ef_dim = 32
    batch = 8

    key = jax.random.PRNGKey(0)
    k_x, k_w1, k_b1, k_w2, k_b2 = jax.random.split(key, 5)

    # nn.Linear(ef_dim, ef_dim): weight (out, in), bias (out,).
    bound = 1.0 / (ef_dim ** 0.5)
    x = jax.random.normal(k_x, (batch, ef_dim), dtype=jnp.float32)
    w1_pt = jax.random.uniform(k_w1, (ef_dim, ef_dim), minval=-bound, maxval=bound)
    b1 = jax.random.uniform(k_b1, (ef_dim,), minval=-bound, maxval=bound)
    w2_pt = jax.random.uniform(k_w2, (ef_dim, ef_dim), minval=-bound, maxval=bound)
    b2 = jax.random.uniform(k_b2, (ef_dim,), minval=-bound, maxval=bound)

    # Kernel consumes (in, out) layout -> transpose the PyTorch-style weights.
    w1 = w1_pt.T
    w2 = w2_pt.T

    out = jax.block_until_ready(pc_resnet_block(x, w1, b1, w2, b2))
    ref = reference(x, w1, b1, w2, b2)
    assert out.shape == (batch, ef_dim)
    assert out.dtype == x.dtype
    assert jnp.allclose(out, ref, atol=1e-5, rtol=1e-5), "mismatch vs reference"

    # Multi-tile + ragged last tile + packing padding (N not a multiple of 4).
    big_n = 1003
    xb = jax.random.normal(jax.random.PRNGKey(1), (big_n, ef_dim), jnp.float32)
    ref_b = reference(xb, w1, b1, w2, b2)
    out_b = jax.block_until_ready(
        pc_resnet_block(xb, w1, b1, w2, b2, tile_rows=96))
    assert out_b.shape == (big_n, ef_dim)
    assert jnp.allclose(out_b, ref_b, atol=1e-5, rtol=1e-5), "mismatch (big N)"

    # bf16-streaming variant (recommended on v6e/v7x): looser tolerance.
    out_bf16 = jax.block_until_ready(
        pc_resnet_block(xb, w1, b1, w2, b2, stream_dtype=jnp.bfloat16))
    assert out_bf16.shape == (big_n, ef_dim)
    assert jnp.allclose(out_bf16, ref_b, atol=6e-2, rtol=6e-2), "mismatch (bf16)"

    print("KERNEL_OK")
</pallas_src>

<mosaic_0001>
module attributes {stable_mosaic.version = 11 : i64} {
  func.func @pc_resnet_block_kernel(%arg0: i32, %arg1: memref<2x128xf32, #tpu.memory_space<vmem>>, %arg2: memref<128x128xf32, #tpu.memory_space<vmem>>, %arg3: memref<1x128xf32, #tpu.memory_space<vmem>>, %arg4: memref<128x128xf32, #tpu.memory_space<vmem>>, %arg5: memref<1x128xf32, #tpu.memory_space<vmem>>, %arg6: memref<2x128xf32, #tpu.memory_space<vmem>>) attributes {dimension_semantics = [#tpu.dimension_semantics<parallel>], iteration_bounds = array<i64: 1>, scalar_prefetch = 0 : i64, scratch_operands = 0 : i64, tpu.core_type = #tpu.core_type<tc>, window_params = [{transform_indices = @transform_0, window_bounds = array<i64: 2, 128>}, {pipeline_mode = #tpu.pipeline_mode<synchronous>, transform_indices = @transform_1, window_bounds = array<i64: 128, 128>}, {pipeline_mode = #tpu.pipeline_mode<synchronous>, transform_indices = @transform_2, window_bounds = array<i64: 1, 128>}, {pipeline_mode = #tpu.pipeline_mode<synchronous>, transform_indices = @transform_3, window_bounds = array<i64: 128, 128>}, {pipeline_mode = #tpu.pipeline_mode<synchronous>, transform_indices = @transform_4, window_bounds = array<i64: 1, 128>}, {transform_indices = @transform_5, window_bounds = array<i64: 2, 128>}]} {
    %c0 = arith.constant 0 : index
    %c0_0 = arith.constant 0 : index
    %0 = vector.load %arg1[%c0, %c0_0] : memref<2x128xf32, #tpu.memory_space<vmem>>, vector<2x128xf32>
    %c0_1 = arith.constant 0 : index
    %c0_2 = arith.constant 0 : index
    %1 = vector.load %arg2[%c0_1, %c0_2] : memref<128x128xf32, #tpu.memory_space<vmem>>, vector<128x128xf32>
    %cst = arith.constant dense<0.000000e+00> : vector<2x128xf32>
    %2 = tpu.matmul %0, %1, %cst {dimension_numbers = #tpu.dot_dimension_numbers<[1], [0], [0], [1], [0, 0, 1, 1], [], []>, precision = #tpu.contract_precision<fp32>} : vector<2x128xf32>, vector<128x128xf32>, vector<2x128xf32> -> vector<2x128xf32>
    %c0_3 = arith.constant 0 : index
    %c0_4 = arith.constant 0 : index
    %3 = vector.load %arg3[%c0_3, %c0_4] : memref<1x128xf32, #tpu.memory_space<vmem>>, vector<1x128xf32>
    %4 = vector.broadcast %3 : vector<1x128xf32> to vector<2x128xf32>
    %5 = arith.addf %2, %4 : vector<2x128xf32>
    %cst_5 = arith.constant 0.00999999977 : f32
    %6 = vector.broadcast %cst_5 : f32 to vector<2x128xf32>
    %7 = arith.mulf %6, %5 : vector<2x128xf32>
    %8 = arith.maximumf %5, %7 : vector<2x128xf32>
    %c0_6 = arith.constant 0 : index
    %c0_7 = arith.constant 0 : index
    %9 = vector.load %arg4[%c0_6, %c0_7] : memref<128x128xf32, #tpu.memory_space<vmem>>, vector<128x128xf32>
    %cst_8 = arith.constant dense<0.000000e+00> : vector<2x128xf32>
    %10 = tpu.matmul %8, %9, %cst_8 {dimension_numbers = #tpu.dot_dimension_numbers<[1], [0], [0], [1], [0, 0, 1, 1], [], []>, precision = #tpu.contract_precision<fp32>} : vector<2x128xf32>, vector<128x128xf32>, vector<2x128xf32> -> vector<2x128xf32>
    %c0_9 = arith.constant 0 : index
    %c0_10 = arith.constant 0 : index
    %11 = vector.load %arg5[%c0_9, %c0_10] : memref<1x128xf32, #tpu.memory_space<vmem>>, vector<1x128xf32>
    %12 = vector.broadcast %11 : vector<1x128xf32> to vector<2x128xf32>
    %13 = arith.addf %10, %12 : vector<2x128xf32>
    %14 = arith.addf %13, %0 : vector<2x128xf32>
    %cst_11 = arith.constant 0.00999999977 : f32
    %15 = vector.broadcast %cst_11 : f32 to vector<2x128xf32>
    %16 = arith.mulf %15, %14 : vector<2x128xf32>
    %17 = arith.maximumf %14, %16 : vector<2x128xf32>
    %c0_12 = arith.constant 0 : index
    %c0_13 = arith.constant 0 : index
    %18 = vector.load %arg6[%c0_12, %c0_13] : memref<2x128xf32, #tpu.memory_space<vmem>>, vector<2x128xf32>
    tpu.vector_store %arg6[%c0_12, %c0_13], %17 {strides = array<i32>} : memref<2x128xf32, #tpu.memory_space<vmem>>, vector<2x128xf32>,
    return
  }
  func.func @transform_0(%arg0: i32) -> (i32, i32) {
    %c0_i32 = arith.constant 0 : i32
    %c0_i32_0 = arith.constant 0 : i32
    return %arg0, %c0_i32 : i32, i32
  }
  func.func @transform_1(%arg0: i32) -> (i32, i32) {
    %c0_i32 = arith.constant 0 : i32
    %c0_i32_0 = arith.constant 0 : i32
    %c0_i32_1 = arith.constant 0 : i32
    return %c0_i32, %c0_i32_0 : i32, i32
  }
  func.func @transform_2(%arg0: i32) -> (i32, i32) {
    %c0_i32 = arith.constant 0 : i32
    %c0_i32_0 = arith.constant 0 : i32
    %c0_i32_1 = arith.constant 0 : i32
    return %c0_i32, %c0_i32_0 : i32, i32
  }
  func.func @transform_3(%arg0: i32) -> (i32, i32) {
    %c0_i32 = arith.constant 0 : i32
    %c0_i32_0 = arith.constant 0 : i32
    %c0_i32_1 = arith.constant 0 : i32
    return %c0_i32, %c0_i32_0 : i32, i32
  }
  func.func @transform_4(%arg0: i32) -> (i32, i32) {
    %c0_i32 = arith.constant 0 : i32
    %c0_i32_0 = arith.constant 0 : i32
    %c0_i32_1 = arith.constant 0 : i32
    return %c0_i32, %c0_i32_0 : i32, i32
  }
  func.func @transform_5(%arg0: i32) -> (i32, i32) {
    %c0_i32 = arith.constant 0 : i32
    %c0_i32_0 = arith.constant 0 : i32
    return %arg0, %c0_i32 : i32, i32
  }
}

</mosaic_0001>

<llo_original>
// kernel: pc_resnet_block.1
$region0: #{pc_resnet_block.1}
  #allocation0 [shape = 'u32[]', space=smem, size = 0x4, offset = 0x4, fixed_abs, tag = 'smem constant byte address 0x4 - core index']
  #allocation1 [shape = 'u32[144,128]{1,0:T(1,128)}', space=vmem, size = 0x12000, scoped, tag = 'internal scratch']
  %s0 = inlined_call_operand.vmem [shape: f32[2,128], index: 0, kind: input, shape index: {}]
  %s1 = inlined_call_operand.vmem [shape: f32[128,128], index: 1, kind: input, shape index: {}]
  %s2 = inlined_call_operand.vmem [shape: f32[1,128], index: 2, kind: input, shape index: {}]
  %s3 = inlined_call_operand.vmem [shape: f32[128,128], index: 3, kind: input, shape index: {}]
  %s4 = inlined_call_operand.vmem [shape: f32[1,128], index: 4, kind: input, shape index: {}]
  %s5 = inlined_call_operand.vmem [shape: f32[2,128], index: 5, kind: output, shape index: {}]
  %s6 = sld [smem:[#allocation0]]
  $region30: #{pc_resnet_block.1} parent=0
    _
  %s8 = ssub.s32 1, %s6
  %s9 = scalar_select 0, %s8, %s6
  // Predicated region
  $region2: #{pc_resnet_block.1} parent=0 // pred_check
    _
  $region3: #{pc_resnet_block.1} parent=0 // pred_check_branch
    %11 = sbr.rel (0) target = $region5
  $region4: #{pc_resnet_block.1} parent=0 // pred_region
    _
  $region5: #{pc_resnet_block.1} parent=0 // pred_fallthru
    _
  // Predicated region
  $region6: #{pc_resnet_block.1} parent=0 // pred_check
    _
  $region7: #{pc_resnet_block.1} parent=0 // pred_check_branch
    %13 = sbr.rel (0) target = $region9
  $region8: #{pc_resnet_block.1} parent=0 // pred_region
    _
  $region9: #{pc_resnet_block.1} parent=0 // pred_fallthru
    _
  // Predicated region
  $region10: #{pc_resnet_block.1} parent=0 // pred_check
    _
  $region11: #{pc_resnet_block.1} parent=0 // pred_check_branch
    %15 = sbr.rel (0) target = $region13
  $region12: #{pc_resnet_block.1} parent=0 // pred_region
    _
  $region13: #{pc_resnet_block.1} parent=0 // pred_fallthru
    _
  // Predicated region
  $region14: #{pc_resnet_block.1} parent=0 // pred_check
    _
  $region15: #{pc_resnet_block.1} parent=0 // pred_check_branch
    %17 = sbr.rel (0) target = $region17
  $region16: #{pc_resnet_block.1} parent=0 // pred_region
    _
  $region17: #{pc_resnet_block.1} parent=0 // pred_fallthru
    _
  // Predicated region
  $region18: #{pc_resnet_block.1} parent=0 // pred_check
    _
  $region19: #{pc_resnet_block.1} parent=0 // pred_check_branch
    %19 = sbr.rel (0) target = $region21
  $region20: #{pc_resnet_block.1} parent=0 // pred_region
    _
  $region21: #{pc_resnet_block.1} parent=0 // pred_fallthru
    _
  %v20 = vld [vmem:[%s0] sm:$0x3]
  %v21 = vld [vmem:[%s1] sm:$0xff]
  %v22 = vld [vmem:[%s1 + $0x8] sm:$0xff]
  %v23 = vld [vmem:[%s1 + $0x10] sm:$0xff]
  %v24 = vld [vmem:[%s1 + $0x18] sm:$0xff]
  %v25 = vld [vmem:[%s1 + $0x20] sm:$0xff]
  %v26 = vld [vmem:[%s1 + $0x28] sm:$0xff]
  %v27 = vld [vmem:[%s1 + $0x30] sm:$0xff]
  %v28 = vld [vmem:[%s1 + $0x38] sm:$0xff]
  %v29 = vld [vmem:[%s1 + $0x40] sm:$0xff]
  %v30 = vld [vmem:[%s1 + $0x48] sm:$0xff]
  %v31 = vld [vmem:[%s1 + $0x50] sm:$0xff]
  %v32 = vld [vmem:[%s1 + $0x58] sm:$0xff]
  %v33 = vld [vmem:[%s1 + $0x60] sm:$0xff]
  %v34 = vld [vmem:[%s1 + $0x68] sm:$0xff]
  %v35 = vld [vmem:[%s1 + $0x70] sm:$0xff]
  %v36 = vld [vmem:[%s1 + $0x78] sm:$0xff]
  %v37 = vld [vmem:[%s2] sm:$0x1]
  %v39 = vlaneseq
  %v40 = vshrl.u32 %v39, 7
  %v41 = vsub.s32 0, %v40
  %v42 = vrot.slane %v37, %v41
  %44 = vmatprep.subr.mxu0 0.0
  %v45 = vand.u32 %v21, 4294901760
  %46 = vmatpush1.msra.mxu0 %v45
  %47 = vmatprep.subr.mxu0 0.0
  %v48 = vand.u32 %v22, 4294901760
  %49 = vmatpush1.msra.mxu0 %v48
  %50 = vmatprep.subr.mxu0 0.0
  %v51 = vand.u32 %v23, 4294901760
  %52 = vmatpush1.msra.mxu0 %v51
  %53 = vmatprep.subr.mxu0 0.0
  %v54 = vand.u32 %v24, 4294901760
  %55 = vmatpush1.msra.mxu0 %v54
  %56 = vmatprep.subr.mxu0 0.0
  %v57 = vand.u32 %v25, 4294901760
  %58 = vmatpush1.msra.mxu0 %v57
  %59 = vmatprep.subr.mxu0 0.0
  %v60 = vand.u32 %v26, 4294901760
  %61 = vmatpush1.msra.mxu0 %v60
  %62 = vmatprep.subr.mxu0 0.0
  %v63 = vand.u32 %v27, 4294901760
  %64 = vmatpush1.msra.mxu0 %v63
  %65 = vmatprep.subr.mxu0 0.0
  %v66 = vand.u32 %v28, 4294901760
  %67 = vmatpush1.msra.mxu0 %v66
  %68 = vmatprep.subr.mxu0 0.0
  %v69 = vand.u32 %v29, 4294901760
  %70 = vmatpush1.msra.mxu0 %v69
  %71 = vmatprep.subr.mxu0 0.0
  %v72 = vand.u32 %v30, 4294901760
  %73 = vmatpush1.msra.mxu0 %v72
  %74 = vmatprep.subr.mxu0 0.0
  %v75 = vand.u32 %v31, 4294901760
  %76 = vmatpush1.msra.mxu0 %v75
  %77 = vmatprep.subr.mxu0 0.0
  %v78 = vand.u32 %v32, 4294901760
  %79 = vmatpush1.msra.mxu0 %v78
  %80 = vmatprep.subr.mxu0 0.0
  %v81 = vand.u32 %v33, 4294901760
  %82 = vmatpush1.msra.mxu0 %v81
  %83 = vmatprep.subr.mxu0 0.0
  %v84 = vand.u32 %v34, 4294901760
  %85 = vmatpush1.msra.mxu0 %v84
  %86 = vmatprep.subr.mxu0 0.0
  %v87 = vand.u32 %v35, 4294901760
  %88 = vmatpush1.msra.mxu0 %v87
  %89 = vmatprep.subr.mxu0 0.0
  %v90 = vand.u32 %v36, 4294901760
  %91 = vmatpush1.msra.mxu0 %v90
  %92 = vmatprep.subr.mxu0 0.0
  %93 = vmatpush1.msra.mxu0 0.0
  %94 = vmatprep.subr.mxu0 0.0
  %95 = vmatpush1.msra.mxu0 0.0
  %96 = vmatprep.subr.mxu0 0.0
  %97 = vmatpush1.msra.mxu0 0.0
  %98 = vmatprep.subr.mxu0 0.0
  %99 = vmatpush1.msra.mxu0 0.0
  %100 = vmatprep.subr.mxu0 0.0
  %101 = vmatpush1.msra.mxu0 0.0
  %102 = vmatprep.subr.mxu0 0.0
  %103 = vmatpush1.msra.mxu0 0.0
  %104 = vmatprep.subr.mxu0 0.0
  %105 = vmatpush1.msra.mxu0 0.0
  %106 = vmatprep.subr.mxu0 0.0
  %107 = vmatpush1.msra.mxu0 0.0
  %108 = vmatprep.subr.mxu0 0.0
  %109 = vmatpush1.msra.mxu0 0.0
  %110 = vmatprep.subr.mxu0 0.0
  %111 = vmatpush1.msra.mxu0 0.0
  %112 = vmatprep.subr.mxu0 0.0
  %113 = vmatpush1.msra.mxu0 0.0
  %114 = vmatprep.subr.mxu0 0.0
  %115 = vmatpush1.msra.mxu0 0.0
  %116 = vmatprep.subr.mxu0 0.0
  %117 = vmatpush1.msra.mxu0 0.0
  %118 = vmatprep.subr.mxu0 0.0
  %119 = vmatpush1.msra.mxu0 0.0
  %120 = vmatprep.subr.mxu0 0.0
  %121 = vmatpush1.msra.mxu0 0.0
  %122 = vmatprep.subr.mxu0 0.0
  %123 = vmatpush1.msra.mxu0 0.0
  %124 = vmatprep.mubr.f32.mxu0 0.0
  %v125 = vand.u32 %v20, 4294901760
  %v126 = vsub.f32 %v20, %v125
  %v127 = vand.u32 %v126, 4294901760
  %v128 = vsub.f32 %v126, %v127
  %v129 = vand.u32 %v128, 4294901760
  %130 = vmatmul.mubr.f32.gmra.mrb[0].mxu0 %v129
  %v131 = vpop.f32.mrb[0].mxu0
  %v132 = vadd.f32 %v42, %v131
  %v133 = vpop.f32.mrb[0].mxu0
  %134 = vdwg.mxu0
  %135 = vmatprep.subr.mxu0 0.0
  %v136 = vand.u32 %v21, 4294901760
  %v137 = vsub.f32 %v21, %v136
  %v138 = vand.u32 %v137, 4294901760
  %v139 = vsub.f32 %v137, %v138
  %v140 = vand.u32 %v139, 4294901760
  %141 = vmatpush1.msra.mxu0 %v140
  %142 = vmatprep.subr.mxu0 0.0
  %v143 = vand.u32 %v22, 4294901760
  %v144 = vsub.f32 %v22, %v143
  %v145 = vand.u32 %v144, 4294901760
  %v146 = vsub.f32 %v144, %v145
  %v147 = vand.u32 %v146, 4294901760
  %148 = vmatpush1.msra.mxu0 %v147
  %149 = vmatprep.subr.mxu0 0.0
  %v150 = vand.u32 %v23, 4294901760
  %v151 = vsub.f32 %v23, %v150
  %v152 = vand.u32 %v151, 4294901760
  %v153 = vsub.f32 %v151, %v152
  %v154 = vand.u32 %v153, 4294901760
  %155 = vmatpush1.msra.mxu0 %v154
  %156 = vmatprep.subr.mxu0 0.0
  %v157 = vand.u32 %v24, 4294901760
  %v158 = vsub.f32 %v24, %v157
  %v159 = vand.u32 %v158, 4294901760
  %v160 = vsub.f32 %v158, %v159
  %v161 = vand.u32 %v160, 4294901760
  %162 = vmatpush1.msra.mxu0 %v161
  %163 = vmatprep.subr.mxu0 0.0
  %v164 = vand.u32 %v25, 4294901760
  %v165 = vsub.f32 %v25, %v164
  %v166 = vand.u32 %v165, 4294901760
  %v167 = vsub.f32 %v165, %v166
  %v168 = vand.u32 %v167, 4294901760
  %169 = vmatpush1.msra.mxu0 %v168
  %170 = vmatprep.subr.mxu0 0.0
  %v171 = vand.u32 %v26, 4294901760
  %v172 = vsub.f32 %v26, %v171
  %v173 = vand.u32 %v172, 4294901760
  %v174 = vsub.f32 %v172, %v173
  %v175 = vand.u32 %v174, 4294901760
  %176 = vmatpush1.msra.mxu0 %v175
  %177 = vmatprep.subr.mxu0 0.0
  %v178 = vand.u32 %v27, 4294901760
  %v179 = vsub.f32 %v27, %v178
  %v180 = vand.u32 %v179, 4294901760
  %v181 = vsub.f32 %v179, %v180
  %v182 = vand.u32 %v181, 4294901760
  %183 = vmatpush1.msra.mxu0 %v182
  %184 = vmatprep.subr.mxu0 0.0
  %v185 = vand.u32 %v28, 4294901760
  %v186 = vsub.f32 %v28, %v185
  %v187 = vand.u32 %v186, 4294901760
  %v188 = vsub.f32 %v186, %v187
  %v189 = vand.u32 %v188, 4294901760
  %190 = vmatpush1.msra.mxu0 %v189
  %191 = vmatprep.subr.mxu0 0.0
  %v192 = vand.u32 %v29, 4294901760
  %v193 = vsub.f32 %v29, %v192
  %v194 = vand.u32 %v193, 4294901760
  %v195 = vsub.f32 %v193, %v194
  %v196 = vand.u32 %v195, 4294901760
  %197 = vmatpush1.msra.mxu0 %v196
  %198 = vmatprep.subr.mxu0 0.0
  %v199 = vand.u32 %v30, 4294901760
  %v200 = vsub.f32 %v30, %v199
  %v201 = vand.u32 %v200, 4294901760
  %v202 = vsub.f32 %v200, %v201
  %v203 = vand.u32 %v202, 4294901760
  %204 = vmatpush1.msra.mxu0 %v203
  %205 = vmatprep.subr.mxu0 0.0
  %v206 = vand.u32 %v31, 4294901760
  %v207 = vsub.f32 %v31, %v206
  %v208 = vand.u32 %v207, 4294901760
  %v209 = vsub.f32 %v207, %v208
  %v210 = vand.u32 %v209, 4294901760
  %211 = vmatpush1.msra.mxu0 %v210
  %212 = vmatprep.subr.mxu0 0.0
  %v213 = vand.u32 %v32, 4294901760
  %v214 = vsub.f32 %v32, %v213
  %v215 = vand.u32 %v214, 4294901760
  %v216 = vsub.f32 %v214, %v215
  %v217 = vand.u32 %v216, 4294901760
  %218 = vmatpush1.msra.mxu0 %v217
  %219 = vmatprep.subr.mxu0 0.0
  %v220 = vand.u32 %v33, 4294901760
  %v221 = vsub.f32 %v33, %v220
  %v222 = vand.u32 %v221, 4294901760
  %v223 = vsub.f32 %v221, %v222
  %v224 = vand.u32 %v223, 4294901760
  %225 = vmatpush1.msra.mxu0 %v224
  %226 = vmatprep.subr.mxu0 0.0
  %v227 = vand.u32 %v34, 4294901760
  %v228 = vsub.f32 %v34, %v227
  %v229 = vand.u32 %v228, 4294901760
  %v230 = vsub.f32 %v228, %v229
  %v231 = vand.u32 %v230, 4294901760
  %232 = vmatpush1.msra.mxu0 %v231
  %233 = vmatprep.subr.mxu0 0.0
  %v234 = vand.u32 %v35, 4294901760
  %v235 = vsub.f32 %v35, %v234
  %v236 = vand.u32 %v235, 4294901760
  %v237 = vsub.f32 %v235, %v236
  %v238 = vand.u32 %v237, 4294901760
  %239 = vmatpush1.msra.mxu0 %v238
  %240 = vmatprep.subr.mxu0 0.0
  %v241 = vand.u32 %v36, 4294901760
  %v242 = vsub.f32 %v36, %v241
  %v243 = vand.u32 %v242, 4294901760
  %v244 = vsub.f32 %v242, %v243
  %v245 = vand.u32 %v244, 4294901760
  %246 = vmatpush1.msra.mxu0 %v245
  %247 = vmatprep.subr.mxu0 0.0
  %248 = vmatpush1.msra.mxu0 0.0
  %249 = vmatprep.subr.mxu0 0.0
  %250 = vmatpush1.msra.mxu0 0.0
  %251 = vmatprep.subr.mxu0 0.0
  %252 = vmatpush1.msra.mxu0 0.0
  %253 = vmatprep.subr.mxu0 0.0
  %254 = vmatpush1.msra.mxu0 0.0
  %255 = vmatprep.subr.mxu0 0.0
  %256 = vmatpush1.msra.mxu0 0.0
  %257 = vmatprep.subr.mxu0 0.0
  %258 = vmatpush1.msra.mxu0 0.0
  %259 = vmatprep.subr.mxu0 0.0
  %260 = vmatpush1.msra.mxu0 0.0
  %261 = vmatprep.subr.mxu0 0.0
  %262 = vmatpush1.msra.mxu0 0.0
  %263 = vmatprep.subr.mxu0 0.0
  %264 = vmatpush1.msra.mxu0 0.0
  %265 = vmatprep.subr.mxu0 0.0
  %266 = vmatpush1.msra.mxu0 0.0
  %267 = vmatprep.subr.mxu0 0.0
  %268 = vmatpush1.msra.mxu0 0.0
  %269 = vmatprep.subr.mxu0 0.0
  %270 = vmatpush1.msra.mxu0 0.0
  %271 = vmatprep.subr.mxu0 0.0
  %272 = vmatpush1.msra.mxu0 0.0
  %273 = vmatprep.subr.mxu0 0.0
  %274 = vmatpush1.msra.mxu0 0.0
  %275 = vmatprep.subr.mxu0 0.0
  %276 = vmatpush1.msra.mxu0 0.0
  %277 = vmatprep.subr.mxu0 0.0
  %278 = vmatpush1.msra.mxu0 0.0
  %279 = vmatprep.mubr.f32.mxu0 0.0
  %v280 = vand.u32 %v20, 4294901760
  %281 = vmatmul.mubr.f32.gmra.mrb[0].mxu0 %v280
  %v282 = vpop.f32.mrb[0].mxu0
  %v283 = vadd.f32 %v132, %v282
  %v284 = vpop.f32.mrb[0].mxu0
  %285 = vdwg.mxu0
  %286 = vmatprep.subr.mxu0 0.0
  %v287 = vand.u32 %v21, 4294901760
  %v288 = vsub.f32 %v21, %v287
  %289 = vmatpush1.msra.mxu0 %v288
  %290 = vmatprep.subr.mxu0 0.0
  %v291 = vand.u32 %v22, 4294901760
  %v292 = vsub.f32 %v22, %v291
  %293 = vmatpush1.msra.mxu0 %v292
  %294 = vmatprep.subr.mxu0 0.0
  %v295 = vand.u32 %v23, 4294901760
  %v296 = vsub.f32 %v23, %v295
  %297 = vmatpush1.msra.mxu0 %v296
  %298 = vmatprep.subr.mxu0 0.0
  %v299 = vand.u32 %v24, 4294901760
  %v300 = vsub.f32 %v24, %v299
  %301 = vmatpush1.msra.mxu0 %v300
  %302 = vmatprep.subr.mxu0 0.0
  %v303 = vand.u32 %v25, 4294901760
  %v304 = vsub.f32 %v25, %v303
  %305 = vmatpush1.msra.mxu0 %v304
  %306 = vmatprep.subr.mxu0 0.0
  %v307 = vand.u32 %v26, 4294901760
  %v308 = vsub.f32 %v26, %v307
  %309 = vmatpush1.msra.mxu0 %v308
  %310 = vmatprep.subr.mxu0 0.0
  %v311 = vand.u32 %v27, 4294901760
  %v312 = vsub.f32 %v27, %v311
  %313 = vmatpush1.msra.mxu0 %v312
  %314 = vmatprep.subr.mxu0 0.0
  %v315 = vand.u32 %v28, 4294901760
  %v316 = vsub.f32 %v28, %v315
  %317 = vmatpush1.msra.mxu0 %v316
  %318 = vmatprep.subr.mxu0 0.0
  %v319 = vand.u32 %v29, 4294901760
  %v320 = vsub.f32 %v29, %v319
  %321 = vmatpush1.msra.mxu0 %v320
  %322 = vmatprep.subr.mxu0 0.0
  %v323 = vand.u32 %v30, 4294901760
  %v324 = vsub.f32 %v30, %v323
  %325 = vmatpush1.msra.mxu0 %v324
  %326 = vmatprep.subr.mxu0 0.0
  %v327 = vand.u32 %v31, 4294901760
  %v328 = vsub.f32 %v31, %v327
  %329 = vmatpush1.msra.mxu0 %v328
  %330 = vmatprep.subr.mxu0 0.0
  %v331 = vand.u32 %v32, 4294901760
  %v332 = vsub.f32 %v32, %v331
  %333 = vmatpush1.msra.mxu0 %v332
  %334 = vmatprep.subr.mxu0 0.0
  %v335 = vand.u32 %v33, 4294901760
  %v336 = vsub.f32 %v33, %v335
  %337 = vmatpush1.msra.mxu0 %v336
  %338 = vmatprep.subr.mxu0 0.0
  %v339 = vand.u32 %v34, 4294901760
  %v340 = vsub.f32 %v34, %v339
  %341 = vmatpush1.msra.mxu0 %v340
  %342 = vmatprep.subr.mxu0 0.0
  %v343 = vand.u32 %v35, 4294901760
  %v344 = vsub.f32 %v35, %v343
  %345 = vmatpush1.msra.mxu0 %v344
  %346 = vmatprep.subr.mxu0 0.0
  %v347 = vand.u32 %v36, 4294901760
  %v348 = vsub.f32 %v36, %v347
  %349 = vmatpush1.msra.mxu0 %v348
  %350 = vmatprep.subr.mxu0 0.0
  %351 = vmatpush1.msra.mxu0 0.0
  %352 = vmatprep.subr.mxu0 0.0
  %353 = vmatpush1.msra.mxu0 0.0
  %354 = vmatprep.subr.mxu0 0.0
  %355 = vmatpush1.msra.mxu0 0.0
  %356 = vmatprep.subr.mxu0 0.0
  %357 = vmatpush1.msra.mxu0 0.0
  %358 = vmatprep.subr.mxu0 0.0
  %359 = vmatpush1.msra.mxu0 0.0
  %360 = vmatprep.subr.mxu0 0.0
  %361 = vmatpush1.msra.mxu0 0.0
  %362 = vmatprep.subr.mxu0 0.0
  %363 = vmatpush1.msra.mxu0 0.0
  %364 = vmatprep.subr.mxu0 0.0
  %365 = vmatpush1.msra.mxu0 0.0
  %366 = vmatprep.subr.mxu0 0.0
  %367 = vmatpush1.msra.mxu0 0.0
  %368 = vmatprep.subr.mxu0 0.0
  %369 = vmatpush1.msra.mxu0 0.0
  %370 = vmatprep.subr.mxu0 0.0
  %371 = vmatpush1.msra.mxu0 0.0
  %372 = vmatprep.subr.mxu0 0.0
  %373 = vmatpush1.msra.mxu0 0.0
  %374 = vmatprep.subr.mxu0 0.0
  %375 = vmatpush1.msra.mxu0 0.0
  %376 = vmatprep.subr.mxu0 0.0
  %377 = vmatpush1.msra.mxu0 0.0
  %378 = vmatprep.subr.mxu0 0.0
  %379 = vmatpush1.msra.mxu0 0.0
  %380 = vmatprep.subr.mxu0 0.0
  %381 = vmatpush1.msra.mxu0 0.0
  %382 = vmatprep.mubr.f32.mxu0 0.0
  %v383 = vand.u32 %v20, 4294901760
  %v384 = vsub.f32 %v20, %v383
  %385 = vmatmul.mubr.f32.gmra.mrb[0].mxu0 %v384
  %v386 = vpop.f32.mrb[0].mxu0
  %v387 = vadd.f32 %v283, %v386
  %v388 = vpop.f32.mrb[0].mxu0
  %389 = vdwg.mxu0
  %390 = vmatprep.subr.mxu0 0.0
  %v391 = vand.u32 %v21, 4294901760
  %392 = vmatpush1.msra.mxu0 %v391
  %393 = vmatprep.subr.mxu0 0.0
  %v394 = vand.u32 %v22, 4294901760
  %395 = vmatpush1.msra.mxu0 %v394
  %396 = vmatprep.subr.mxu0 0.0
  %v397 = vand.u32 %v23, 4294901760
  %398 = vmatpush1.msra.mxu0 %v397
  %399 = vmatprep.subr.mxu0 0.0
  %v400 = vand.u32 %v24, 4294901760
  %401 = vmatpush1.msra.mxu0 %v400
  %402 = vmatprep.subr.mxu0 0.0
  %v403 = vand.u32 %v25, 4294901760
  %404 = vmatpush1.msra.mxu0 %v403
  %405 = vmatprep.subr.mxu0 0.0
  %v406 = vand.u32 %v26, 4294901760
  %407 = vmatpush1.msra.mxu0 %v406
  %408 = vmatprep.subr.mxu0 0.0
  %v409 = vand.u32 %v27, 4294901760
  %410 = vmatpush1.msra.mxu0 %v409
  %411 = vmatprep.subr.mxu0 0.0
  %v412 = vand.u32 %v28, 4294901760
  %413 = vmatpush1.msra.mxu0 %v412
  %414 = vmatprep.subr.mxu0 0.0
  %v415 = vand.u32 %v29, 4294901760
  %416 = vmatpush1.msra.mxu0 %v415
  %417 = vmatprep.subr.mxu0 0.0
  %v418 = vand.u32 %v30, 4294901760
  %419 = vmatpush1.msra.mxu0 %v418
  %420 = vmatprep.subr.mxu0 0.0
  %v421 = vand.u32 %v31, 4294901760
  %422 = vmatpush1.msra.mxu0 %v421
  %423 = vmatprep.subr.mxu0 0.0
  %v424 = vand.u32 %v32, 4294901760
  %425 = vmatpush1.msra.mxu0 %v424
  %426 = vmatprep.subr.mxu0 0.0
  %v427 = vand.u32 %v33, 4294901760
  %428 = vmatpush1.msra.mxu0 %v427
  %429 = vmatprep.subr.mxu0 0.0
  %v430 = vand.u32 %v34, 4294901760
  %431 = vmatpush1.msra.mxu0 %v430
  %432 = vmatprep.subr.mxu0 0.0
  %v433 = vand.u32 %v35, 4294901760
  %434 = vmatpush1.msra.mxu0 %v433
  %435 = vmatprep.subr.mxu0 0.0
  %v436 = vand.u32 %v36, 4294901760
  %437 = vmatpush1.msra.mxu0 %v436
  %438 = vmatprep.subr.mxu0 0.0
  %439 = vmatpush1.msra.mxu0 0.0
  %440 = vmatprep.subr.mxu0 0.0
  %441 = vmatpush1.msra.mxu0 0.0
  %442 = vmatprep.subr.mxu0 0.0
  %443 = vmatpush1.msra.mxu0 0.0
  %444 = vmatprep.subr.mxu0 0.0
  %445 = vmatpush1.msra.mxu0 0.0
  %446 = vmatprep.subr.mxu0 0.0
  %447 = vmatpush1.msra.mxu0 0.0
  %448 = vmatprep.subr.mxu0 0.0
  %449 = vmatpush1.msra.mxu0 0.0
  %450 = vmatprep.subr.mxu0 0.0
  %451 = vmatpush1.msra.mxu0 0.0
  %452 = vmatprep.subr.mxu0 0.0
  %453 = vmatpush1.msra.mxu0 0.0
  %454 = vmatprep.subr.mxu0 0.0
  %455 = vmatpush1.msra.mxu0 0.0
  %456 = vmatprep.subr.mxu0 0.0
  %457 = vmatpush1.msra.mxu0 0.0
  %458 = vmatprep.subr.mxu0 0.0
  %459 = vmatpush1.msra.mxu0 0.0
  %460 = vmatprep.subr.mxu0 0.0
  %461 = vmatpush1.msra.mxu0 0.0
  %462 = vmatprep.subr.mxu0 0.0
  %463 = vmatpush1.msra.mxu0 0.0
  %464 = vmatprep.subr.mxu0 0.0
  %465 = vmatpush1.msra.mxu0 0.0
  %466 = vmatprep.subr.mxu0 0.0
  %467 = vmatpush1.msra.mxu0 0.0
  %468 = vmatprep.subr.mxu0 0.0
  %469 = vmatpush1.msra.mxu0 0.0
  %470 = vmatprep.mubr.f32.mxu0 0.0
  %v471 = vand.u32 %v20, 4294901760
  %v472 = vsub.f32 %v20, %v471
  %v473 = vand.u32 %v472, 4294901760
  %474 = vmatmul.mubr.f32.gmra.mrb[0].mxu0 %v473
  %v475 = vpop.f32.mrb[0].mxu0
  %v476 = vadd.f32 %v387, %v475
  %v477 = vpop.f32.mrb[0].mxu0
  %478 = vdwg.mxu0
  %479 = vmatprep.subr.mxu0 0.0
  %v480 = vand.u32 %v21, 4294901760
  %v481 = vsub.f32 %v21, %v480
  %v482 = vand.u32 %v481, 4294901760
  %483 = vmatpush1.msra.mxu0 %v482
  %484 = vmatprep.subr.mxu0 0.0
  %v485 = vand.u32 %v22, 4294901760
  %v486 = vsub.f32 %v22, %v485
  %v487 = vand.u32 %v486, 4294901760
  %488 = vmatpush1.msra.mxu0 %v487
  %489 = vmatprep.subr.mxu0 0.0
  %v490 = vand.u32 %v23, 4294901760
  %v491 = vsub.f32 %v23, %v490
  %v492 = vand.u32 %v491, 4294901760
  %493 = vmatpush1.msra.mxu0 %v492
  %494 = vmatprep.subr.mxu0 0.0
  %v495 = vand.u32 %v24, 4294901760
  %v496 = vsub.f32 %v24, %v495
  %v497 = vand.u32 %v496, 4294901760
  %498 = vmatpush1.msra.mxu0 %v497
  %499 = vmatprep.subr.mxu0 0.0
  %v500 = vand.u32 %v25, 4294901760
  %v501 = vsub.f32 %v25, %v500
  %v502 = vand.u32 %v501, 4294901760
  %503 = vmatpush1.msra.mxu0 %v502
  %504 = vmatprep.subr.mxu0 0.0
  %v505 = vand.u32 %v26, 4294901760
  %v506 = vsub.f32 %v26, %v505
  %v507 = vand.u32 %v506, 4294901760
  %508 = vmatpush1.msra.mxu0 %v507
  %509 = vmatprep.subr.mxu0 0.0
  %v510 = vand.u32 %v27, 4294901760
  %v511 = vsub.f32 %v27, %v510
  %v512 = vand.u32 %v511, 4294901760
  %513 = vmatpush1.msra.mxu0 %v512
  %514 = vmatprep.subr.mxu0 0.0
  %v515 = vand.u32 %v28, 4294901760
  %v516 = vsub.f32 %v28, %v515
  %v517 = vand.u32 %v516, 4294901760
  %518 = vmatpush1.msra.mxu0 %v517
  %519 = vmatprep.subr.mxu0 0.0
  %v520 = vand.u32 %v29, 4294901760
  %v521 = vsub.f32 %v29, %v520
  %v522 = vand.u32 %v521, 4294901760
  %523 = vmatpush1.msra.mxu0 %v522
  %524 = vmatprep.subr.mxu0 0.0
  %v525 = vand.u32 %v30, 4294901760
  %v526 = vsub.f32 %v30, %v525
  %v527 = vand.u32 %v526, 4294901760
  %528 = vmatpush1.msra.mxu0 %v527
  %529 = vmatprep.subr.mxu0 0.0
  %v530 = vand.u32 %v31, 4294901760
  %v531 = vsub.f32 %v31, %v530
  %v532 = vand.u32 %v531, 4294901760
  %533 = vmatpush1.msra.mxu0 %v532
  %534 = vmatprep.subr.mxu0 0.0
  %v535 = vand.u32 %v32, 4294901760
  %v536 = vsub.f32 %v32, %v535
  %v537 = vand.u32 %v536, 4294901760
  %538 = vmatpush1.msra.mxu0 %v537
  %539 = vmatprep.subr.mxu0 0.0
  %v540 = vand.u32 %v33, 4294901760
  %v541 = vsub.f32 %v33, %v540
  %v542 = vand.u32 %v541, 4294901760
  %543 = vmatpush1.msra.mxu0 %v542
  %544 = vmatprep.subr.mxu0 0.0
  %v545 = vand.u32 %v34, 4294901760
  %v546 = vsub.f32 %v34, %v545
  %v547 = vand.u32 %v546, 4294901760
  %548 = vmatpush1.msra.mxu0 %v547
  %549 = vmatprep.subr.mxu0 0.0
  %v550 = vand.u32 %v35, 4294901760
  %v551 = vsub.f32 %v35, %v550
  %v552 = vand.u32 %v551, 4294901760
  %553 = vmatpush1.msra.mxu0 %v552
  %554 = vmatprep.subr.mxu0 0.0
  %v555 = vand.u32 %v36, 4294901760
  %v556 = vsub.f32 %v36, %v555
  %v557 = vand.u32 %v556, 4294901760
  %558 = vmatpush1.msra.mxu0 %v557
  %559 = vmatprep.subr.mxu0 0.0
  %560 = vmatpush1.msra.mxu0 0.0
  %561 = vmatprep.subr.mxu0 0.0
  %562 = vmatpush1.msra.mxu0 0.0
  %563 = vmatprep.subr.mxu0 0.0
  %564 = vmatpush1.msra.mxu0 0.0
  %565 = vmatprep.subr.mxu0 0.0
  %566 = vmatpush1.msra.mxu0 0.0
  %567 = vmatprep.subr.mxu0 0.0
  %568 = vmatpush1.msra.mxu0 0.0
  %569 = vmatprep.subr.mxu0 0.0
  %570 = vmatpush1.msra.mxu0 0.0
  %571 = vmatprep.subr.mxu0 0.0
  %572 = vmatpush1.msra.mxu0 0.0
  %573 = vmatprep.subr.mxu0 0.0
  %574 = vmatpush1.msra.mxu0 0.0
  %575 = vmatprep.subr.mxu0 0.0
  %576 = vmatpush1.msra.mxu0 0.0
  %577 = vmatprep.subr.mxu0 0.0
  %578 = vmatpush1.msra.mxu0 0.0
  %579 = vmatprep.subr.mxu0 0.0
  %580 = vmatpush1.msra.mxu0 0.0
  %581 = vmatprep.subr.mxu0 0.0
  %582 = vmatpush1.msra.mxu0 0.0
  %583 = vmatprep.subr.mxu0 0.0
  %584 = vmatpush1.msra.mxu0 0.0
  %585 = vmatprep.subr.mxu0 0.0
  %586 = vmatpush1.msra.mxu0 0.0
  %587 = vmatprep.subr.mxu0 0.0
  %588 = vmatpush1.msra.mxu0 0.0
  %589 = vmatprep.subr.mxu0 0.0
  %590 = vmatpush1.msra.mxu0 0.0
  %591 = vmatprep.mubr.f32.mxu0 0.0
  %v592 = vand.u32 %v20, 4294901760
  %593 = vmatmul.mubr.f32.gmra.mrb[0].mxu0 %v592
  %v594 = vpop.f32.mrb[0].mxu0
  %v595 = vadd.f32 %v476, %v594
  %v596 = vpop.f32.mrb[0].mxu0
  %597 = vdwg.mxu0
  %598 = vmatprep.subr.mxu0 0.0
  %v599 = vand.u32 %v21, 4294901760
  %600 = vmatpush1.msra.mxu0 %v599
  %601 = vmatprep.subr.mxu0 0.0
  %v602 = vand.u32 %v22, 4294901760
  %603 = vmatpush1.msra.mxu0 %v602
  %604 = vmatprep.subr.mxu0 0.0
  %v605 = vand.u32 %v23, 4294901760
  %606 = vmatpush1.msra.mxu0 %v605
  %607 = vmatprep.subr.mxu0 0.0
  %v608 = vand.u32 %v24, 4294901760
  %609 = vmatpush1.msra.mxu0 %v608
  %610 = vmatprep.subr.mxu0 0.0
  %v611 = vand.u32 %v25, 4294901760
  %612 = vmatpush1.msra.mxu0 %v611
  %613 = vmatprep.subr.mxu0 0.0
  %v614 = vand.u32 %v26, 4294901760
  %615 = vmatpush1.msra.mxu0 %v614
  %616 = vmatprep.subr.mxu0 0.0
  %v617 = vand.u32 %v27, 4294901760
  %618 = vmatpush1.msra.mxu0 %v617
  %619 = vmatprep.subr.mxu0 0.0
  %v620 = vand.u32 %v28, 4294901760
  %621 = vmatpush1.msra.mxu0 %v620
  %622 = vmatprep.subr.mxu0 0.0
  %v623 = vand.u32 %v29, 4294901760
  %624 = vmatpush1.msra.mxu0 %v623
  %625 = vmatprep.subr.mxu0 0.0
  %v626 = vand.u32 %v30, 4294901760
  %627 = vmatpush1.msra.mxu0 %v626
  %628 = vmatprep.subr.mxu0 0.0
  %v629 = vand.u32 %v31, 4294901760
  %630 = vmatpush1.msra.mxu0 %v629
  %631 = vmatprep.subr.mxu0 0.0
  %v632 = vand.u32 %v32, 4294901760
  %633 = vmatpush1.msra.mxu0 %v632
  %634 = vmatprep.subr.mxu0 0.0
  %v635 = vand.u32 %v33, 4294901760
  %636 = vmatpush1.msra.mxu0 %v635
  %637 = vmatprep.subr.mxu0 0.0
  %v638 = vand.u32 %v34, 4294901760
  %639 = vmatpush1.msra.mxu0 %v638
  %640 = vmatprep.subr.mxu0 0.0
  %v641 = vand.u32 %v35, 4294901760
  %642 = vmatpush1.msra.mxu0 %v641
  %643 = vmatprep.subr.mxu0 0.0
  %v644 = vand.u32 %v36, 4294901760
  %645 = vmatpush1.msra.mxu0 %v644
  %646 = vmatprep.subr.mxu0 0.0
  %647 = vmatpush1.msra.mxu0 0.0
  %648 = vmatprep.subr.mxu0 0.0
  %649 = vmatpush1.msra.mxu0 0.0
  %650 = vmatprep.subr.mxu0 0.0
  %651 = vmatpush1.msra.mxu0 0.0
  %652 = vmatprep.subr.mxu0 0.0
  %653 = vmatpush1.msra.mxu0 0.0
  %654 = vmatprep.subr.mxu0 0.0
  %655 = vmatpush1.msra.mxu0 0.0
  %656 = vmatprep.subr.mxu0 0.0
  %657 = vmatpush1.msra.mxu0 0.0
  %658 = vmatprep.subr.mxu0 0.0
  %659 = vmatpush1.msra.mxu0 0.0
  %660 = vmatprep.subr.mxu0 0.0
  %661 = vmatpush1.msra.mxu0 0.0
  %662 = vmatprep.subr.mxu0 0.0
  %663 = vmatpush1.msra.mxu0 0.0
  %664 = vmatprep.subr.mxu0 0.0
  %665 = vmatpush1.msra.mxu0 0.0
  %666 = vmatprep.subr.mxu0 0.0
  %667 = vmatpush1.msra.mxu0 0.0
  %668 = vmatprep.subr.mxu0 0.0
  %669 = vmatpush1.msra.mxu0 0.0
  %670 = vmatprep.subr.mxu0 0.0
  %671 = vmatpush1.msra.mxu0 0.0
  %672 = vmatprep.subr.mxu0 0.0
  %673 = vmatpush1.msra.mxu0 0.0
  %674 = vmatprep.subr.mxu0 0.0
  %675 = vmatpush1.msra.mxu0 0.0
  %676 = vmatprep.subr.mxu0 0.0
  %677 = vmatpush1.msra.mxu0 0.0
  %678 = vmatprep.mubr.f32.mxu0 0.0
  %v679 = vand.u32 %v20, 4294901760
  %680 = vmatmul.mubr.f32.gmra.mrb[0].mxu0 %v679
  %v681 = vpop.f32.mrb[0].mxu0
  %v682 = vadd.f32 %v595, %v681
  %v683 = vpop.f32.mrb[0].mxu0
  %684 = vdwg.mxu0
  %v685 = vmul.f32 %v682, 0.01
  %v686 = vmax.f32 %v682, %v685
  %v687 = vld [vmem:[%s3] sm:$0xff]
  %v688 = vld [vmem:[%s3 + $0x8] sm:$0xff]
  %v689 = vld [vmem:[%s3 + $0x10] sm:$0xff]
  %v690 = vld [vmem:[%s3 + $0x18] sm:$0xff]
  %v691 = vld [vmem:[%s3 + $0x20] sm:$0xff]
  %v692 = vld [vmem:[%s3 + $0x28] sm:$0xff]
  %v693 = vld [vmem:[%s3 + $0x30] sm:$0xff]
  %v694 = vld [vmem:[%s3 + $0x38] sm:$0xff]
  %v695 = vld [vmem:[%s3 + $0x40] sm:$0xff]
  %v696 = vld [vmem:[%s3 + $0x48] sm:$0xff]
  %v697 = vld [vmem:[%s3 + $0x50] sm:$0xff]
  %v698 = vld [vmem:[%s3 + $0x58] sm:$0xff]
  %v699 = vld [vmem:[%s3 + $0x60] sm:$0xff]
  %v700 = vld [vmem:[%s3 + $0x68] sm:$0xff]
  %v701 = vld [vmem:[%s3 + $0x70] sm:$0xff]
  %v702 = vld [vmem:[%s3 + $0x78] sm:$0xff]
  %v703 = vld [vmem:[%s4] sm:$0x1]
  %v705 = vlaneseq
  %v706 = vshrl.u32 %v705, 7
  %v707 = vsub.s32 0, %v706
  %v708 = vrot.slane %v703, %v707
  %710 = vmatprep.subr.mxu0 0.0
  %v711 = vand.u32 %v687, 4294901760
  %712 = vmatpush1.msra.mxu0 %v711
  %713 = vmatprep.subr.mxu0 0.0
  %v714 = vand.u32 %v688, 4294901760
  %715 = vmatpush1.msra.mxu0 %v714
  %716 = vmatprep.subr.mxu0 0.0
  %v717 = vand.u32 %v689, 4294901760
  %718 = vmatpush1.msra.mxu0 %v717
  %719 = vmatprep.subr.mxu0 0.0
  %v720 = vand.u32 %v690, 4294901760
  %721 = vmatpush1.msra.mxu0 %v720
  %722 = vmatprep.subr.mxu0 0.0
  %v723 = vand.u32 %v691, 4294901760
  %724 = vmatpush1.msra.mxu0 %v723
  %725 = vmatprep.subr.mxu0 0.0
  %v726 = vand.u32 %v692, 4294901760
  %727 = vmatpush1.msra.mxu0 %v726
  %728 = vmatprep.subr.mxu0 0.0
  %v729 = vand.u32 %v693, 4294901760
  %730 = vmatpush1.msra.mxu0 %v729
  %731 = vmatprep.subr.mxu0 0.0
  %v732 = vand.u32 %v694, 4294901760
  %733 = vmatpush1.msra.mxu0 %v732
  %734 = vmatprep.subr.mxu0 0.0
  %v735 = vand.u32 %v695, 4294901760
  %736 = vmatpush1.msra.mxu0 %v735
  %737 = vmatprep.subr.mxu0 0.0
  %v738 = vand.u32 %v696, 4294901760
  %739 = vmatpush1.msra.mxu0 %v738
  %740 = vmatprep.subr.mxu0 0.0
  %v741 = vand.u32 %v697, 4294901760
  %742 = vmatpush1.msra.mxu0 %v741
  %743 = vmatprep.subr.mxu0 0.0
  %v744 = vand.u32 %v698, 4294901760
  %745 = vmatpush1.msra.mxu0 %v744
  %746 = vmatprep.subr.mxu0 0.0
  %v747 = vand.u32 %v699, 4294901760
  %748 = vmatpush1.msra.mxu0 %v747
  %749 = vmatprep.subr.mxu0 0.0
  %v750 = vand.u32 %v700, 4294901760
  %751 = vmatpush1.msra.mxu0 %v750
  %752 = vmatprep.subr.mxu0 0.0
  %v753 = vand.u32 %v701, 4294901760
  %754 = vmatpush1.msra.mxu0 %v753
  %755 = vmatprep.subr.mxu0 0.0
  %v756 = vand.u32 %v702, 4294901760
  %757 = vmatpush1.msra.mxu0 %v756
  %758 = vmatprep.subr.mxu0 0.0
  %759 = vmatpush1.msra.mxu0 0.0
  %760 = vmatprep.subr.mxu0 0.0
  %761 = vmatpush1.msra.mxu0 0.0
  %762 = vmatprep.subr.mxu0 0.0
  %763 = vmatpush1.msra.mxu0 0.0
  %764 = vmatprep.subr.mxu0 0.0
  %765 = vmatpush1.msra.mxu0 0.0
  %766 = vmatprep.subr.mxu0 0.0
  %767 = vmatpush1.msra.mxu0 0.0
  %768 = vmatprep.subr.mxu0 0.0
  %769 = vmatpush1.msra.mxu0 0.0
  %770 = vmatprep.subr.mxu0 0.0
  %771 = vmatpush1.msra.mxu0 0.0
  %772 = vmatprep.subr.mxu0 0.0
  %773 = vmatpush1.msra.mxu0 0.0
  %774 = vmatprep.subr.mxu0 0.0
  %775 = vmatpush1.msra.mxu0 0.0
  %776 = vmatprep.subr.mxu0 0.0
  %777 = vmatpush1.msra.mxu0 0.0
  %778 = vmatprep.subr.mxu0 0.0
  %779 = vmatpush1.msra.mxu0 0.0
  %780 = vmatprep.subr.mxu0 0.0
  %781 = vmatpush1.msra.mxu0 0.0
  %782 = vmatprep.subr.mxu0 0.0
  %783 = vmatpush1.msra.mxu0 0.0
  %784 = vmatprep.subr.mxu0 0.0
  %785 = vmatpush1.msra.mxu0 0.0
  %786 = vmatprep.subr.mxu0 0.0
  %787 = vmatpush1.msra.mxu0 0.0
  %788 = vmatprep.subr.mxu0 0.0
  %789 = vmatpush1.msra.mxu0 0.0
  %790 = vmatprep.mubr.f32.mxu0 0.0
  %v791 = vand.u32 %v686, 4294901760
  %v792 = vsub.f32 %v686, %v791
  %v793 = vand.u32 %v792, 4294901760
  %v794 = vsub.f32 %v792, %v793
  %v795 = vand.u32 %v794, 4294901760
  %796 = vmatmul.mubr.f32.gmra.mrb[0].mxu0 %v795
  %v797 = vpop.f32.mrb[0].mxu0
  %v798 = vadd.f32 %v708, %v797
  %v799 = vpop.f32.mrb[0].mxu0
  %800 = vdwg.mxu0
  %801 = vmatprep.subr.mxu0 0.0
  %v802 = vand.u32 %v687, 4294901760
  %v803 = vsub.f32 %v687, %v802
  %v804 = vand.u32 %v803, 4294901760
  %v805 = vsub.f32 %v803, %v804
  %v806 = vand.u32 %v805, 4294901760
  %807 = vmatpush1.msra.mxu0 %v806
  %808 = vmatprep.subr.mxu0 0.0
  %v809 = vand.u32 %v688, 4294901760
  %v810 = vsub.f32 %v688, %v809
  %v811 = vand.u32 %v810, 4294901760
  %v812 = vsub.f32 %v810, %v811
  %v813 = vand.u32 %v812, 4294901760
  %814 = vmatpush1.msra.mxu0 %v813
  %815 = vmatprep.subr.mxu0 0.0
  %v816 = vand.u32 %v689, 4294901760
  %v817 = vsub.f32 %v689, %v816
  %v818 = vand.u32 %v817, 4294901760
  %v819 = vsub.f32 %v817, %v818
  %v820 = vand.u32 %v819, 4294901760
  %821 = vmatpush1.msra.mxu0 %v820
  %822 = vmatprep.subr.mxu0 0.0
  %v823 = vand.u32 %v690, 4294901760
  %v824 = vsub.f32 %v690, %v823
  %v825 = vand.u32 %v824, 4294901760
  %v826 = vsub.f32 %v824, %v825
  %v827 = vand.u32 %v826, 4294901760
  %828 = vmatpush1.msra.mxu0 %v827
  %829 = vmatprep.subr.mxu0 0.0
  %v830 = vand.u32 %v691, 4294901760
  %v831 = vsub.f32 %v691, %v830
  %v832 = vand.u32 %v831, 4294901760
  %v833 = vsub.f32 %v831, %v832
  %v834 = vand.u32 %v833, 4294901760
  %835 = vmatpush1.msra.mxu0 %v834
  %836 = vmatprep.subr.mxu0 0.0
  %v837 = vand.u32 %v692, 4294901760
  %v838 = vsub.f32 %v692, %v837
  %v839 = vand.u32 %v838, 4294901760
  %v840 = vsub.f32 %v838, %v839
  %v841 = vand.u32 %v840, 4294901760
  %842 = vmatpush1.msra.mxu0 %v841
  %843 = vmatprep.subr.mxu0 0.0
  %v844 = vand.u32 %v693, 4294901760
  %v845 = vsub.f32 %v693, %v844
  %v846 = vand.u32 %v845, 4294901760
  %v847 = vsub.f32 %v845, %v846
  %v848 = vand.u32 %v847, 4294901760
  %849 = vmatpush1.msra.mxu0 %v848
  %850 = vmatprep.subr.mxu0 0.0
  %v851 = vand.u32 %v694, 4294901760
  %v852 = vsub.f32 %v694, %v851
  %v853 = vand.u32 %v852, 4294901760
  %v854 = vsub.f32 %v852, %v853
  %v855 = vand.u32 %v854, 4294901760
  %856 = vmatpush1.msra.mxu0 %v855
  %857 = vmatprep.subr.mxu0 0.0
  %v858 = vand.u32 %v695, 4294901760
  %v859 = vsub.f32 %v695, %v858
  %v860 = vand.u32 %v859, 4294901760
  %v861 = vsub.f32 %v859, %v860
  %v862 = vand.u32 %v861, 4294901760
  %863 = vmatpush1.msra.mxu0 %v862
  %864 = vmatprep.subr.mxu0 0.0
  %v865 = vand.u32 %v696, 4294901760
  %v866 = vsub.f32 %v696, %v865
  %v867 = vand.u32 %v866, 4294901760
  %v868 = vsub.f32 %v866, %v867
  %v869 = vand.u32 %v868, 4294901760
  %870 = vmatpush1.msra.mxu0 %v869
  %871 = vmatprep.subr.mxu0 0.0
  %v872 = vand.u32 %v697, 4294901760
  %v873 = vsub.f32 %v697, %v872
  %v874 = vand.u32 %v873, 4294901760
  %v875 = vsub.f32 %v873, %v874
  %v876 = vand.u32 %v875, 4294901760
  %877 = vmatpush1.msra.mxu0 %v876
  %878 = vmatprep.subr.mxu0 0.0
  %v879 = vand.u32 %v698, 4294901760
  %v880 = vsub.f32 %v698, %v879
  %v881 = vand.u32 %v880, 4294901760
  %v882 = vsub.f32 %v880, %v881
  %v883 = vand.u32 %v882, 4294901760
  %884 = vmatpush1.msra.mxu0 %v883
  %885 = vmatprep.subr.mxu0 0.0
  %v886 = vand.u32 %v699, 4294901760
  %v887 = vsub.f32 %v699, %v886
  %v888 = vand.u32 %v887, 4294901760
  %v889 = vsub.f32 %v887, %v888
  %v890 = vand.u32 %v889, 4294901760
  %891 = vmatpush1.msra.mxu0 %v890
  %892 = vmatprep.subr.mxu0 0.0
  %v893 = vand.u32 %v700, 4294901760
  %v894 = vsub.f32 %v700, %v893
  %v895 = vand.u32 %v894, 4294901760
  %v896 = vsub.f32 %v894, %v895
  %v897 = vand.u32 %v896, 4294901760
  %898 = vmatpush1.msra.mxu0 %v897
  %899 = vmatprep.subr.mxu0 0.0
  %v900 = vand.u32 %v701, 4294901760
  %v901 = vsub.f32 %v701, %v900
  %v902 = vand.u32 %v901, 4294901760
  %v903 = vsub.f32 %v901, %v902
  %v904 = vand.u32 %v903, 4294901760
  %905 = vmatpush1.msra.mxu0 %v904
  %906 = vmatprep.subr.mxu0 0.0
  %v907 = vand.u32 %v702, 4294901760
  %v908 = vsub.f32 %v702, %v907
  %v909 = vand.u32 %v908, 4294901760
  %v910 = vsub.f32 %v908, %v909
  %v911 = vand.u32 %v910, 4294901760
  %912 = vmatpush1.msra.mxu0 %v911
  %913 = vmatprep.subr.mxu0 0.0
  %914 = vmatpush1.msra.mxu0 0.0
  %915 = vmatprep.subr.mxu0 0.0
  %916 = vmatpush1.msra.mxu0 0.0
  %917 = vmatprep.subr.mxu0 0.0
  %918 = vmatpush1.msra.mxu0 0.0
  %919 = vmatprep.subr.mxu0 0.0
  %920 = vmatpush1.msra.mxu0 0.0
  %921 = vmatprep.subr.mxu0 0.0
  %922 = vmatpush1.msra.mxu0 0.0
  %923 = vmatprep.subr.mxu0 0.0
  %924 = vmatpush1.msra.mxu0 0.0
  %925 = vmatprep.subr.mxu0 0.0
  %926 = vmatpush1.msra.mxu0 0.0
  %927 = vmatprep.subr.mxu0 0.0
  %928 = vmatpush1.msra.mxu0 0.0
  %929 = vmatprep.subr.mxu0 0.0
  %930 = vmatpush1.msra.mxu0 0.0
  %931 = vmatprep.subr.mxu0 0.0
  %932 = vmatpush1.msra.mxu0 0.0
  %933 = vmatprep.subr.mxu0 0.0
  %934 = vmatpush1.msra.mxu0 0.0
  %935 = vmatprep.subr.mxu0 0.0
  %936 = vmatpush1.msra.mxu0 0.0
  %937 = vmatprep.subr.mxu0 0.0
  %938 = vmatpush1.msra.mxu0 0.0
  %939 = vmatprep.subr.mxu0 0.0
  %940 = vmatpush1.msra.mxu0 0.0
  %941 = vmatprep.subr.mxu0 0.0
  %942 = vmatpush1.msra.mxu0 0.0
  %943 = vmatprep.subr.mxu0 0.0
  %944 = vmatpush1.msra.mxu0 0.0
  %945 = vmatprep.mubr.f32.mxu0 0.0
  %v946 = vand.u32 %v686, 4294901760
  %947 = vmatmul.mubr.f32.gmra.mrb[0].mxu0 %v946
  %v948 = vpop.f32.mrb[0].mxu0
  %v949 = vadd.f32 %v798, %v948
  %v950 = vpop.f32.mrb[0].mxu0
  %951 = vdwg.mxu0
  %952 = vmatprep.subr.mxu0 0.0
  %v953 = vand.u32 %v687, 4294901760
  %v954 = vsub.f32 %v687, %v953
  %955 = vmatpush1.msra.mxu0 %v954
  %956 = vmatprep.subr.mxu0 0.0
  %v957 = vand.u32 %v688, 4294901760
  %v958 = vsub.f32 %v688, %v957
  %959 = vmatpush1.msra.mxu0 %v958
  %960 = vmatprep.subr.mxu0 0.0
  %v961 = vand.u32 %v689, 4294901760
  %v962 = vsub.f32 %v689, %v961
  %963 = vmatpush1.msra.mxu0 %v962
  %964 = vmatprep.subr.mxu0 0.0
  %v965 = vand.u32 %v690, 4294901760
  %v966 = vsub.f32 %v690, %v965
  %967 = vmatpush1.msra.mxu0 %v966
  %968 = vmatprep.subr.mxu0 0.0
  %v969 = vand.u32 %v691, 4294901760
  %v970 = vsub.f32 %v691, %v969
  %971 = vmatpush1.msra.mxu0 %v970
  %972 = vmatprep.subr.mxu0 0.0
  %v973 = vand.u32 %v692, 4294901760
  %v974 = vsub.f32 %v692, %v973
  %975 = vmatpush1.msra.mxu0 %v974
  %976 = vmatprep.subr.mxu0 0.0
  %v977 = vand.u32 %v693, 4294901760
  %v978 = vsub.f32 %v693, %v977
  %979 = vmatpush1.msra.mxu0 %v978
  %980 = vmatprep.subr.mxu0 0.0
  %v981 = vand.u32 %v694, 4294901760
  %v982 = vsub.f32 %v694, %v981
  %983 = vmatpush1.msra.mxu0 %v982
  %984 = vmatprep.subr.mxu0 0.0
  %v985 = vand.u32 %v695, 4294901760
  %v986 = vsub.f32 %v695, %v985
  %987 = vmatpush1.msra.mxu0 %v986
  %988 = vmatprep.subr.mxu0 0.0
  %v989 = vand.u32 %v696, 4294901760
  %v990 = vsub.f32 %v696, %v989
  %991 = vmatpush1.msra.mxu0 %v990
  %992 = vmatprep.subr.mxu0 0.0
  %v993 = vand.u32 %v697, 4294901760
  %v994 = vsub.f32 %v697, %v993
  %995 = vmatpush1.msra.mxu0 %v994
  %996 = vmatprep.subr.mxu0 0.0
  %v997 = vand.u32 %v698, 4294901760
  %v998 = vsub.f32 %v698, %v997
  %999 = vmatpush1.msra.mxu0 %v998
  %1000 = vmatprep.subr.mxu0 0.0
  %v1001 = vand.u32 %v699, 4294901760
  %v1002 = vsub.f32 %v699, %v1001
  %1003 = vmatpush1.msra.mxu0 %v1002
  %1004 = vmatprep.subr.mxu0 0.0
  %v1005 = vand.u32 %v700, 4294901760
  %v1006 = vsub.f32 %v700, %v1005
  %1007 = vmatpush1.msra.mxu0 %v1006
  %1008 = vmatprep.subr.mxu0 0.0
  %v1009 = vand.u32 %v701, 4294901760
  %v1010 = vsub.f32 %v701, %v1009
  %1011 = vmatpush1.msra.mxu0 %v1010
  %1012 = vmatprep.subr.mxu0 0.0
  %v1013 = vand.u32 %v702, 4294901760
  %v1014 = vsub.f32 %v702, %v1013
  %1015 = vmatpush1.msra.mxu0 %v1014
  %1016 = vmatprep.subr.mxu0 0.0
  %1017 = vmatpush1.msra.mxu0 0.0
  %1018 = vmatprep.subr.mxu0 0.0
  %1019 = vmatpush1.msra.mxu0 0.0
  %1020 = vmatprep.subr.mxu0 0.0
  %1021 = vmatpush1.msra.mxu0 0.0
  %1022 = vmatprep.subr.mxu0 0.0
  %1023 = vmatpush1.msra.mxu0 0.0
  %1024 = vmatprep.subr.mxu0 0.0
  %1025 = vmatpush1.msra.mxu0 0.0
  %1026 = vmatprep.subr.mxu0 0.0
  %1027 = vmatpush1.msra.mxu0 0.0
  %1028 = vmatprep.subr.mxu0 0.0
  %1029 = vmatpush1.msra.mxu0 0.0
  %1030 = vmatprep.subr.mxu0 0.0
  %1031 = vmatpush1.msra.mxu0 0.0
  %1032 = vmatprep.subr.mxu0 0.0
  %1033 = vmatpush1.msra.mxu0 0.0
  %1034 = vmatprep.subr.mxu0 0.0
  %1035 = vmatpush1.msra.mxu0 0.0
  %1036 = vmatprep.subr.mxu0 0.0
  %1037 = vmatpush1.msra.mxu0 0.0
  %1038 = vmatprep.subr.mxu0 0.0
  %1039 = vmatpush1.msra.mxu0 0.0
  %1040 = vmatprep.subr.mxu0 0.0
  %1041 = vmatpush1.msra.mxu0 0.0
  %1042 = vmatprep.subr.mxu0 0.0
  %1043 = vmatpush1.msra.mxu0 0.0
  %1044 = vmatprep.subr.mxu0 0.0
  %1045 = vmatpush1.msra.mxu0 0.0
  %1046 = vmatprep.subr.mxu0 0.0
  %1047 = vmatpush1.msra.mxu0 0.0
  %1048 = vmatprep.mubr.f32.mxu0 0.0
  %v1049 = vand.u32 %v686, 4294901760
  %v1050 = vsub.f32 %v686, %v1049
  %1051 = vmatmul.mubr.f32.gmra.mrb[0].mxu0 %v1050
  %v1052 = vpop.f32.mrb[0].mxu0
  %v1053 = vadd.f32 %v949, %v1052
  %v1054 = vpop.f32.mrb[0].mxu0
  %1055 = vdwg.mxu0
  %1056 = vmatprep.subr.mxu0 0.0
  %v1057 = vand.u32 %v687, 4294901760
  %1058 = vmatpush1.msra.mxu0 %v1057
  %1059 = vmatprep.subr.mxu0 0.0
  %v1060 = vand.u32 %v688, 4294901760
  %1061 = vmatpush1.msra.mxu0 %v1060
  %1062 = vmatprep.subr.mxu0 0.0
  %v1063 = vand.u32 %v689, 4294901760
  %1064 = vmatpush1.msra.mxu0 %v1063
  %1065 = vmatprep.subr.mxu0 0.0
  %v1066 = vand.u32 %v690, 4294901760
  %1067 = vmatpush1.msra.mxu0 %v1066
  %1068 = vmatprep.subr.mxu0 0.0
  %v1069 = vand.u32 %v691, 4294901760
  %1070 = vmatpush1.msra.mxu0 %v1069
  %1071 = vmatprep.subr.mxu0 0.0
  %v1072 = vand.u32 %v692, 4294901760
  %1073 = vmatpush1.msra.mxu0 %v1072
  %1074 = vmatprep.subr.mxu0 0.0
  %v1075 = vand.u32 %v693, 4294901760
  %1076 = vmatpush1.msra.mxu0 %v1075
  %1077 = vmatprep.subr.mxu0 0.0
  %v1078 = vand.u32 %v694, 4294901760
  %1079 = vmatpush1.msra.mxu0 %v1078
  %1080 = vmatprep.subr.mxu0 0.0
  %v1081 = vand.u32 %v695, 4294901760
  %1082 = vmatpush1.msra.mxu0 %v1081
  %1083 = vmatprep.subr.mxu0 0.0
  %v1084 = vand.u32 %v696, 4294901760
  %1085 = vmatpush1.msra.mxu0 %v1084
  %1086 = vmatprep.subr.mxu0 0.0
  %v1087 = vand.u32 %v697, 4294901760
  %1088 = vmatpush1.msra.mxu0 %v1087
  %1089 = vmatprep.subr.mxu0 0.0
  %v1090 = vand.u32 %v698, 4294901760
  %1091 = vmatpush1.msra.mxu0 %v1090
  %1092 = vmatprep.subr.mxu0 0.0
  %v1093 = vand.u32 %v699, 4294901760
  %1094 = vmatpush1.msra.mxu0 %v1093
  %1095 = vmatprep.subr.mxu0 0.0
  %v1096 = vand.u32 %v700, 4294901760
  %1097 = vmatpush1.msra.mxu0 %v1096
  %1098 = vmatprep.subr.mxu0 0.0
  %v1099 = vand.u32 %v701, 4294901760
  %1100 = vmatpush1.msra.mxu0 %v1099
  %1101 = vmatprep.subr.mxu0 0.0
  %v1102 = vand.u32 %v702, 4294901760
  %1103 = vmatpush1.msra.mxu0 %v1102
  %1104 = vmatprep.subr.mxu0 0.0
  %1105 = vmatpush1.msra.mxu0 0.0
  %1106 = vmatprep.subr.mxu0 0.0
  %1107 = vmatpush1.msra.mxu0 0.0
  %1108 = vmatprep.subr.mxu0 0.0
  %1109 = vmatpush1.msra.mxu0 0.0
  %1110 = vmatprep.subr.mxu0 0.0
  %1111 = vmatpush1.msra.mxu0 0.0
  %1112 = vmatprep.subr.mxu0 0.0
  %1113 = vmatpush1.msra.mxu0 0.0
  %1114 = vmatprep.subr.mxu0 0.0
  %1115 = vmatpush1.msra.mxu0 0.0
  %1116 = vmatprep.subr.mxu0 0.0
  %1117 = vmatpush1.msra.mxu0 0.0
  %1118 = vmatprep.subr.mxu0 0.0
  %1119 = vmatpush1.msra.mxu0 0.0
  %1120 = vmatprep.subr.mxu0 0.0
  %1121 = vmatpush1.msra.mxu0 0.0
  %1122 = vmatprep.subr.mxu0 0.0
  %1123 = vmatpush1.msra.mxu0 0.0
  %1124 = vmatprep.subr.mxu0 0.0
  %1125 = vmatpush1.msra.mxu0 0.0
  %1126 = vmatprep.subr.mxu0 0.0
  %1127 = vmatpush1.msra.mxu0 0.0
  %1128 = vmatprep.subr.mxu0 0.0
  %1129 = vmatpush1.msra.mxu0 0.0
  %1130 = vmatprep.subr.mxu0 0.0
  %1131 = vmatpush1.msra.mxu0 0.0
  %1132 = vmatprep.subr.mxu0 0.0
  %1133 = vmatpush1.msra.mxu0 0.0
  %1134 = vmatprep.subr.mxu0 0.0
  %1135 = vmatpush1.msra.mxu0 0.0
  %1136 = vmatprep.mubr.f32.mxu0 0.0
  %v1137 = vand.u32 %v686, 4294901760
  %v1138 = vsub.f32 %v686, %v1137
  %v1139 = vand.u32 %v1138, 4294901760
  %1140 = vmatmul.mubr.f32.gmra.mrb[0].mxu0 %v1139
  %v1141 = vpop.f32.mrb[0].mxu0
  %v1142 = vadd.f32 %v1053, %v1141
  %v1143 = vpop.f32.mrb[0].mxu0
  %1144 = vdwg.mxu0
  %1145 = vmatprep.subr.mxu0 0.0
  %v1146 = vand.u32 %v687, 4294901760
  %v1147 = vsub.f32 %v687, %v1146
  %v1148 = vand.u32 %v1147, 4294901760
  %1149 = vmatpush1.msra.mxu0 %v1148
  %1150 = vmatprep.subr.mxu0 0.0
  %v1151 = vand.u32 %v688, 4294901760
  %v1152 = vsub.f32 %v688, %v1151
  %v1153 = vand.u32 %v1152, 4294901760
  %1154 = vmatpush1.msra.mxu0 %v1153
  %1155 = vmatprep.subr.mxu0 0.0
  %v1156 = vand.u32 %v689, 4294901760
  %v1157 = vsub.f32 %v689, %v1156
  %v1158 = vand.u32 %v1157, 4294901760
  %1159 = vmatpush1.msra.mxu0 %v1158
  %1160 = vmatprep.subr.mxu0 0.0
  %v1161 = vand.u32 %v690, 4294901760
  %v1162 = vsub.f32 %v690, %v1161
  %v1163 = vand.u32 %v1162, 4294901760
  %1164 = vmatpush1.msra.mxu0 %v1163
  %1165 = vmatprep.subr.mxu0 0.0
  %v1166 = vand.u32 %v691, 4294901760
  %v1167 = vsub.f32 %v691, %v1166
  %v1168 = vand.u32 %v1167, 4294901760
  %1169 = vmatpush1.msra.mxu0 %v1168
  %1170 = vmatprep.subr.mxu0 0.0
  %v1171 = vand.u32 %v692, 4294901760
  %v1172 = vsub.f32 %v692, %v1171
  %v1173 = vand.u32 %v1172, 4294901760
  %1174 = vmatpush1.msra.mxu0 %v1173
  %1175 = vmatprep.subr.mxu0 0.0
  %v1176 = vand.u32 %v693, 4294901760
  %v1177 = vsub.f32 %v693, %v1176
  %v1178 = vand.u32 %v1177, 4294901760
  %1179 = vmatpush1.msra.mxu0 %v1178
  %1180 = vmatprep.subr.mxu0 0.0
  %v1181 = vand.u32 %v694, 4294901760
  %v1182 = vsub.f32 %v694, %v1181
  %v1183 = vand.u32 %v1182, 4294901760
  %1184 = vmatpush1.msra.mxu0 %v1183
  %1185 = vmatprep.subr.mxu0 0.0
  %v1186 = vand.u32 %v695, 4294901760
  %v1187 = vsub.f32 %v695, %v1186
  %v1188 = vand.u32 %v1187, 4294901760
  %1189 = vmatpush1.msra.mxu0 %v1188
  %1190 = vmatprep.subr.mxu0 0.0
  %v1191 = vand.u32 %v696, 4294901760
  %v1192 = vsub.f32 %v696, %v1191
  %v1193 = vand.u32 %v1192, 4294901760
  %1194 = vmatpush1.msra.mxu0 %v1193
  %1195 = vmatprep.subr.mxu0 0.0
  %v1196 = vand.u32 %v697, 4294901760
  %v1197 = vsub.f32 %v697, %v1196
  %v1198 = vand.u32 %v1197, 4294901760
  %1199 = vmatpush1.msra.mxu0 %v1198
  %1200 = vmatprep.subr.mxu0 0.0
  %v1201 = vand.u32 %v698, 4294901760
  %v1202 = vsub.f32 %v698, %v1201
  %v1203 = vand.u32 %v1202, 4294901760
  %1204 = vmatpush1.msra.mxu0 %v1203
  %1205 = vmatprep.subr.mxu0 0.0
  %v1206 = vand.u32 %v699, 4294901760
  %v1207 = vsub.f32 %v699, %v1206
  %v1208 = vand.u32 %v1207, 4294901760
  %1209 = vmatpush1.msra.mxu0 %v1208
  %1210 = vmatprep.subr.mxu0 0.0
  %v1211 = vand.u32 %v700, 4294901760
  %v1212 = vsub.f32 %v700, %v1211
  %v1213 = vand.u32 %v1212, 4294901760
  %1214 = vmatpush1.msra.mxu0 %v1213
  %1215 = vmatprep.subr.mxu0 0.0
  %v1216 = vand.u32 %v701, 4294901760
  %v1217 = vsub.f32 %v701, %v1216
  %v1218 = vand.u32 %v1217, 4294901760
  %1219 = vmatpush1.msra.mxu0 %v1218
  %1220 = vmatprep.subr.mxu0 0.0
  %v1221 = vand.u32 %v702, 4294901760
  %v1222 = vsub.f32 %v702, %v1221
  %v1223 = vand.u32 %v1222, 4294901760
  %1224 = vmatpush1.msra.mxu0 %v1223
  %1225 = vmatprep.subr.mxu0 0.0
  %1226 = vmatpush1.msra.mxu0 0.0
  %1227 = vmatprep.subr.mxu0 0.0
  %1228 = vmatpush1.msra.mxu0 0.0
  %1229 = vmatprep.subr.mxu0 0.0
  %1230 = vmatpush1.msra.mxu0 0.0
  %1231 = vmatprep.subr.mxu0 0.0
  %1232 = vmatpush1.msra.mxu0 0.0
  %1233 = vmatprep.subr.mxu0 0.0
  %1234 = vmatpush1.msra.mxu0 0.0
  %1235 = vmatprep.subr.mxu0 0.0
  %1236 = vmatpush1.msra.mxu0 0.0
  %1237 = vmatprep.subr.mxu0 0.0
  %1238 = vmatpush1.msra.mxu0 0.0
  %1239 = vmatprep.subr.mxu0 0.0
  %1240 = vmatpush1.msra.mxu0 0.0
  %1241 = vmatprep.subr.mxu0 0.0
  %1242 = vmatpush1.msra.mxu0 0.0
  %1243 = vmatprep.subr.mxu0 0.0
  %1244 = vmatpush1.msra.mxu0 0.0
  %1245 = vmatprep.subr.mxu0 0.0
  %1246 = vmatpush1.msra.mxu0 0.0
  %1247 = vmatprep.subr.mxu0 0.0
  %1248 = vmatpush1.msra.mxu0 0.0
  %1249 = vmatprep.subr.mxu0 0.0
  %1250 = vmatpush1.msra.mxu0 0.0
  %1251 = vmatprep.subr.mxu0 0.0
  %1252 = vmatpush1.msra.mxu0 0.0
  %1253 = vmatprep.subr.mxu0 0.0
  %1254 = vmatpush1.msra.mxu0 0.0
  %1255 = vmatprep.subr.mxu0 0.0
  %1256 = vmatpush1.msra.mxu0 0.0
  %1257 = vmatprep.mubr.f32.mxu0 0.0
  %v1258 = vand.u32 %v686, 4294901760
  %1259 = vmatmul.mubr.f32.gmra.mrb[0].mxu0 %v1258
  %v1260 = vpop.f32.mrb[0].mxu0
  %v1261 = vadd.f32 %v1142, %v1260
  %v1262 = vpop.f32.mrb[0].mxu0
  %1263 = vdwg.mxu0
  %1264 = vmatprep.subr.mxu0 0.0
  %v1265 = vand.u32 %v687, 4294901760
  %1266 = vmatpush1.msra.mxu0 %v1265
  %1267 = vmatprep.subr.mxu0 0.0
  %v1268 = vand.u32 %v688, 4294901760
  %1269 = vmatpush1.msra.mxu0 %v1268
  %1270 = vmatprep.subr.mxu0 0.0
  %v1271 = vand.u32 %v689, 4294901760
  %1272 = vmatpush1.msra.mxu0 %v1271
  %1273 = vmatprep.subr.mxu0 0.0
  %v1274 = vand.u32 %v690, 4294901760
  %1275 = vmatpush1.msra.mxu0 %v1274
  %1276 = vmatprep.subr.mxu0 0.0
  %v1277 = vand.u32 %v691, 4294901760
  %1278 = vmatpush1.msra.mxu0 %v1277
  %1279 = vmatprep.subr.mxu0 0.0
  %v1280 = vand.u32 %v692, 4294901760
  %1281 = vmatpush1.msra.mxu0 %v1280
  %1282 = vmatprep.subr.mxu0 0.0
  %v1283 = vand.u32 %v693, 4294901760
  %1284 = vmatpush1.msra.mxu0 %v1283
  %1285 = vmatprep.subr.mxu0 0.0
  %v1286 = vand.u32 %v694, 4294901760
  %1287 = vmatpush1.msra.mxu0 %v1286
  %1288 = vmatprep.subr.mxu0 0.0
  %v1289 = vand.u32 %v695, 4294901760
  %1290 = vmatpush1.msra.mxu0 %v1289
  %1291 = vmatprep.subr.mxu0 0.0
  %v1292 = vand.u32 %v696, 4294901760
  %1293 = vmatpush1.msra.mxu0 %v1292
  %1294 = vmatprep.subr.mxu0 0.0
  %v1295 = vand.u32 %v697, 4294901760
  %1296 = vmatpush1.msra.mxu0 %v1295
  %1297 = vmatprep.subr.mxu0 0.0
  %v1298 = vand.u32 %v698, 4294901760
  %1299 = vmatpush1.msra.mxu0 %v1298
  %1300 = vmatprep.subr.mxu0 0.0
  %v1301 = vand.u32 %v699, 4294901760
  %1302 = vmatpush1.msra.mxu0 %v1301
  %1303 = vmatprep.subr.mxu0 0.0
  %v1304 = vand.u32 %v700, 4294901760
  %1305 = vmatpush1.msra.mxu0 %v1304
  %1306 = vmatprep.subr.mxu0 0.0
  %v1307 = vand.u32 %v701, 4294901760
  %1308 = vmatpush1.msra.mxu0 %v1307
  %1309 = vmatprep.subr.mxu0 0.0
  %v1310 = vand.u32 %v702, 4294901760
  %1311 = vmatpush1.msra.mxu0 %v1310
  %1312 = vmatprep.subr.mxu0 0.0
  %1313 = vmatpush1.msra.mxu0 0.0
  %1314 = vmatprep.subr.mxu0 0.0
  %1315 = vmatpush1.msra.mxu0 0.0
  %1316 = vmatprep.subr.mxu0 0.0
  %1317 = vmatpush1.msra.mxu0 0.0
  %1318 = vmatprep.subr.mxu0 0.0
  %1319 = vmatpush1.msra.mxu0 0.0
  %1320 = vmatprep.subr.mxu0 0.0
  %1321 = vmatpush1.msra.mxu0 0.0
  %1322 = vmatprep.subr.mxu0 0.0
  %1323 = vmatpush1.msra.mxu0 0.0
  %1324 = vmatprep.subr.mxu0 0.0
  %1325 = vmatpush1.msra.mxu0 0.0
  %1326 = vmatprep.subr.mxu0 0.0
  %1327 = vmatpush1.msra.mxu0 0.0
  %1328 = vmatprep.subr.mxu0 0.0
  %1329 = vmatpush1.msra.mxu0 0.0
  %1330 = vmatprep.subr.mxu0 0.0
  %1331 = vmatpush1.msra.mxu0 0.0
  %1332 = vmatprep.subr.mxu0 0.0
  %1333 = vmatpush1.msra.mxu0 0.0
  %1334 = vmatprep.subr.mxu0 0.0
  %1335 = vmatpush1.msra.mxu0 0.0
  %1336 = vmatprep.subr.mxu0 0.0
  %1337 = vmatpush1.msra.mxu0 0.0
  %1338 = vmatprep.subr.mxu0 0.0
  %1339 = vmatpush1.msra.mxu0 0.0
  %1340 = vmatprep.subr.mxu0 0.0
  %1341 = vmatpush1.msra.mxu0 0.0
  %1342 = vmatprep.subr.mxu0 0.0
  %1343 = vmatpush1.msra.mxu0 0.0
  %1344 = vmatprep.mubr.f32.mxu0 0.0
  %v1345 = vand.u32 %v686, 4294901760
  %1346 = vmatmul.mubr.f32.gmra.mrb[0].mxu0 %v1345
  %v1347 = vpop.f32.mrb[0].mxu0
  %v1348 = vadd.f32 %v1261, %v1347
  %v1349 = vpop.f32.mrb[0].mxu0
  %1350 = vdwg.mxu0
  %v1351 = vadd.f32 %v1348, %v20
  %v1352 = vmul.f32 %v1351, 0.01
  %v1353 = vmax.f32 %v1351, %v1352
  %1354 = vst [vmem:[%s5] sm:$0x3] %v1353
  // Predicated region
  $region22: #{pc_resnet_block.1} parent=0 // pred_check
    _
  $region23: #{pc_resnet_block.1} parent=0 // pred_check_branch
    %1356 = sbr.rel (0) target = $region25
  $region24: #{pc_resnet_block.1} parent=0 // pred_region
    _
  $region25: #{pc_resnet_block.1} parent=0 // pred_fallthru
    _
  // Predicated region
  $region26: #{pc_resnet_block.1} parent=0 // pred_check
    _
  $region27: #{pc_resnet_block.1} parent=0 // pred_check_branch
    %1358 = sbr.rel (0) target = $region29
  $region28: #{pc_resnet_block.1} parent=0 // pred_region
    _
  $region29: #{pc_resnet_block.1} parent=0 // pred_fallthru
    _

</llo_original>
